<compile_context>
chip_gen: v6e
topology: v6e:2x2x1
jax: 0.10.0
libtpu: 0.0.40
codegen_flags: <defaults>
</compile_context>

<pallas_src>
import jax
import jax.numpy as jnp
import numpy as np
from jax import lax
from jax.experimental import pallas as pl
from jax.experimental.pallas import tpu as pltpu


def _round_up(x, m):
    return (x + m - 1) // m * m


def _to_i32(v):
    v &= 0xFFFFFFFF
    return v - (1 << 32) if v >= (1 << 31) else v


def basic_block_forward(x_nchw, weight, gamma, beta, running_mean, running_var,
                        *, rate=0.3, eps=1e-5, seed=0):
    """conv3x3 (pad=1, no bias) -> BN (running stats) -> ReLU -> MC dropout."""
    x_nchw = x_nchw.astype(jnp.float32)
    N, Cin, H, W = x_nchw.shape
    Cout = weight.shape[0]

    K = 9 * Cin                     # real contraction size (taps x Cin, packed)
    Kp = _round_up(K, 128)          # lane-dense contraction block
    Coutp = _round_up(Cout, 128)    # lane-dense output channels
    M = N * H * W                   # batch folded into the matmul M dim
    Mp = _round_up(M, 8)

    # ---------------- wrapper-side layout plumbing (trace-time) ----------------
    # im2col: 9 shifted views of the halo-padded NHWC image, packed along the
    # contraction dim.  Output rows = N*H*W (no halo columns in M).
    x = jnp.transpose(x_nchw, (0, 2, 3, 1))                           # NHWC
    xp = jnp.pad(x, ((0, 0), (1, 1), (1, 1), (0, 0)))                 # (N, H+2, W+2, Cin)
    taps = [xp[:, dy:dy + H, dx:dx + W, :] for dy in range(3) for dx in range(3)]
    patches = jnp.concatenate(taps, axis=-1).reshape(M, K)            # (M, 9*Cin)
    patches = jnp.pad(patches, ((0, Mp - M), (0, Kp - K)))
    patches = patches.astype(jnp.bfloat16)                            # bf16 MXU operand

    # weight (Cout, Cin, 3, 3) -> tap-major (9*Cin, Cout) slab; fold BN scale in.
    scale = (gamma / jnp.sqrt(running_var + eps)).astype(jnp.float32)  # (Cout,)
    bias = (beta - running_mean * scale).astype(jnp.float32)           # (Cout,)
    w = jnp.transpose(weight.astype(jnp.float32), (2, 3, 1, 0))        # (3,3,Cin,Cout)
    w = w.reshape(K, Cout) * scale[None, :]
    w = jnp.pad(w, ((0, Kp - K), (0, Coutp - Cout))).astype(jnp.bfloat16)
    bias2d = jnp.pad(bias.reshape(1, Cout), ((0, 0), (0, Coutp - Cout)))

    # dropout constants: 24-bit integer threshold on a counter-based hash
    keep_prob = float(1.0 - rate)
    thresh24 = min(int(keep_prob * (1 << 24)), (1 << 24) - 1)
    inv_keep = float(1.0 / keep_prob)
    seed_mix = _to_i32(int(seed) * 0x9E3779B9)
    m1 = _to_i32(0x7FEB352D)
    m2 = _to_i32(0x846CA68B)

    # M tile: fat tiles amortize per-step overhead on single-TC chips, but keep
    # >=2 grid points so v7x can shard them across its two TensorCores.
    if Mp % 16 == 0 and Mp // 2 <= 4096:
        Mt = Mp // 2
    else:
        Mt = Mp
        for cand in (4096, 2048, 1024, 512, 256, 128, 64, 32, 16, 8):
            if Mp % cand == 0:
                Mt = cand
                break
    grid_m = Mp // Mt
    # TODO(synk): at ResNet scale additionally tile K, set an explicit
    # vmem_limit_bytes (v7x: 64 MiB physical / 32 MiB scoped default), and keep
    # activations in the lane-padded (M, C) layout between layers to skip the
    # output strip/transpose re-read.

    def kernel(p_ref, w_ref, b_ref, o_ref):
        # p_ref: (Mt, Kp) bf16   w_ref: (Kp, Coutp) bf16   b_ref: (1, Coutp) f32
        # One MXU matmul does the whole 3x3 conv for this M tile (taps are
        # packed into the contraction dim); BN scale is already folded into w.
        acc = jnp.dot(p_ref[...], w_ref[...],
                      preferred_element_type=jnp.float32)          # (Mt, Coutp)
        y = jnp.maximum(acc + b_ref[...], 0.0)                     # BN bias + ReLU

        # MC dropout (F.dropout default training=True -> always active):
        # counter-based integer hash + integer threshold compare.
        # TODO(synk): counter is int32 -- widen / re-seed per grid step once
        # Mp*Coutp approaches 2^31.
        row = lax.broadcasted_iota(jnp.int32, (Mt, Coutp), 0)
        col = lax.broadcasted_iota(jnp.int32, (Mt, Coutp), 1)
        v = (pl.program_id(0) * Mt + row) * Coutp + col
        v = v ^ jnp.int32(seed_mix)
        v = v ^ lax.shift_right_logical(v, 16)
        v = v * jnp.int32(m1)
        v = v ^ lax.shift_right_logical(v, 15)
        v = v * jnp.int32(m2)
        v = v ^ lax.shift_right_logical(v, 16)
        r = lax.shift_right_logical(v, 8)           # top 24 bits, non-negative
        keep = r < jnp.int32(thresh24)
        o_ref[...] = jnp.where(keep, y * inv_keep, 0.0)

    out_slab = pl.pallas_call(
        kernel,
        out_shape=jax.ShapeDtypeStruct((Mp, Coutp), jnp.float32),
        grid=(grid_m,),
        in_specs=[
            pl.BlockSpec((Mt, Kp), lambda m: (m, 0)),       # packed im2col patches
            pl.BlockSpec((Kp, Coutp), lambda m: (0, 0)),    # BN-folded weight slab
            pl.BlockSpec((1, Coutp), lambda m: (0, 0)),     # folded BN bias
        ],
        out_specs=pl.BlockSpec((Mt, Coutp), lambda m: (m, 0)),
        compiler_params=pltpu.CompilerParams(
            dimension_semantics=("parallel",)),    # v7x: M tiles across both TCs
    )(patches, w, bias2d)

    # strip M / channel padding; back to NCHW
    out = out_slab[:M, :Cout].reshape(N, H, W, Cout)
    return jnp.transpose(out, (0, 3, 1, 2))


if __name__ == "__main__":
    # small shapes consistent with the module: N=2, Cin=4, Cout=8, H=W=16
    N, Cin, Cout, H, W = 2, 4, 8, 16, 16
    rate, eps = 0.3, 1e-5

    key = jax.random.PRNGKey(0)
    kx, kw, kg, kb, km, kv = jax.random.split(key, 6)
    x = jax.random.normal(kx, (N, Cin, H, W), dtype=jnp.float32)
    weight = jax.random.normal(kw, (Cout, Cin, 3, 3), dtype=jnp.float32) * 0.1
    gamma = jax.random.normal(kg, (Cout,), dtype=jnp.float32) * 0.1 + 1.0
    beta = jax.random.normal(kb, (Cout,), dtype=jnp.float32) * 0.1
    running_mean = jax.random.normal(km, (Cout,), dtype=jnp.float32) * 0.1
    running_var = jnp.abs(jax.random.normal(kv, (Cout,), dtype=jnp.float32)) + 1.0

    out = basic_block_forward(x, weight, gamma, beta, running_mean, running_var,
                              rate=rate, eps=eps, seed=0)
    out = jax.block_until_ready(out)

    # reference for the deterministic part (conv + BN + ReLU, before dropout)
    ref = lax.conv_general_dilated(
        x, weight, window_strides=(1, 1), padding="SAME",
        dimension_numbers=("NCHW", "OIHW", "NCHW"),
        precision=lax.Precision.HIGHEST)
    ref = (ref - running_mean[None, :, None, None]) / jnp.sqrt(
        running_var[None, :, None, None] + eps)
    ref = ref * gamma[None, :, None, None] + beta[None, :, None, None]
    ref = jnp.maximum(ref, 0.0)

    out_np = np.asarray(out)
    ref_np = np.asarray(ref)
    assert out_np.shape == (N, Cout, H, W)

    # every surviving (non-dropped) element must equal ref / keep_prob
    # (tolerance covers bf16 MXU operands; accumulation is f32)
    kept = out_np != 0.0
    np.testing.assert_allclose(out_np[kept] * (1.0 - rate), ref_np[kept],
                               rtol=2e-2, atol=2e-2)
    # dropout sanity: survival rate among clearly-positive elements ~ keep_prob
    pos = ref_np > 1e-3
    if pos.sum() > 100:
        frac = float((out_np[pos] != 0.0).mean())
        assert 0.45 < frac < 0.95, frac
    print("KERNEL_OK")
</pallas_src>

<mosaic_0001>
module attributes {stable_mosaic.version = 11 : i64} {
  func.func @kernel(%arg0: i32, %arg1: memref<256x128xbf16, #tpu.memory_space<vmem>>, %arg2: memref<128x128xbf16, #tpu.memory_space<vmem>>, %arg3: memref<1x128xf32, #tpu.memory_space<vmem>>, %arg4: memref<256x128xf32, #tpu.memory_space<vmem>>) attributes {dimension_semantics = [#tpu.dimension_semantics<parallel>], iteration_bounds = array<i64: 2>, scalar_prefetch = 0 : i64, scratch_operands = 0 : i64, tpu.core_type = #tpu.core_type<tc>, window_params = [{transform_indices = @transform_0, window_bounds = array<i64: 256, 128>}, {pipeline_mode = #tpu.pipeline_mode<synchronous>, transform_indices = @transform_1, window_bounds = array<i64: 128, 128>}, {pipeline_mode = #tpu.pipeline_mode<synchronous>, transform_indices = @transform_2, window_bounds = array<i64: 1, 128>}, {transform_indices = @transform_3, window_bounds = array<i64: 256, 128>}]} {
    %c0 = arith.constant 0 : index
    %c0_0 = arith.constant 0 : index
    %0 = vector.load %arg1[%c0, %c0_0] : memref<256x128xbf16, #tpu.memory_space<vmem>>, vector<256x128xbf16>
    %c0_1 = arith.constant 0 : index
    %c0_2 = arith.constant 0 : index
    %1 = vector.load %arg2[%c0_1, %c0_2] : memref<128x128xbf16, #tpu.memory_space<vmem>>, vector<128x128xbf16>
    %cst = arith.constant dense<0.000000e+00> : vector<256x128xf32>
    %2 = tpu.matmul %0, %1, %cst {dimension_numbers = #tpu.dot_dimension_numbers<[1], [0], [0], [1], [0, 0, 1, 1], [], []>} : vector<256x128xbf16>, vector<128x128xbf16>, vector<256x128xf32> -> vector<256x128xf32>
    %c0_3 = arith.constant 0 : index
    %c0_4 = arith.constant 0 : index
    %3 = vector.load %arg3[%c0_3, %c0_4] : memref<1x128xf32, #tpu.memory_space<vmem>>, vector<1x128xf32>
    %4 = vector.broadcast %3 : vector<1x128xf32> to vector<256x128xf32>
    %5 = arith.addf %2, %4 : vector<256x128xf32>
    %cst_5 = arith.constant 0.000000e+00 : f32
    %6 = vector.broadcast %cst_5 : f32 to vector<256x128xf32>
    %7 = arith.maximumf %5, %6 : vector<256x128xf32>
    %8 = tpu.iota {dimensions = array<i32: 0>} : vector<256x128xi32>
    %9 = tpu.iota {dimensions = array<i32: 1>} : vector<256x128xi32>
    %c256_i32 = arith.constant 256 : i32
    %10 = arith.muli %arg0, %c256_i32 : i32
    %11 = vector.broadcast %10 : i32 to vector<256x128xi32>
    %12 = arith.addi %11, %8 : vector<256x128xi32>
    %c128_i32 = arith.constant 128 : i32
    %13 = vector.broadcast %c128_i32 : i32 to vector<256x128xi32>
    %14 = arith.muli %12, %13 : vector<256x128xi32>
    %15 = arith.addi %14, %9 : vector<256x128xi32>
    %c0_i32 = arith.constant 0 : i32
    %16 = vector.broadcast %c0_i32 : i32 to vector<256x128xi32>
    %17 = arith.xori %15, %16 : vector<256x128xi32>
    %c16_i32 = arith.constant 16 : i32
    %18 = vector.broadcast %c16_i32 : i32 to vector<256x128xi32>
    %19 = arith.shrui %17, %18 : vector<256x128xi32>
    %20 = arith.xori %17, %19 : vector<256x128xi32>
    %c2146121005_i32 = arith.constant 2146121005 : i32
    %21 = vector.broadcast %c2146121005_i32 : i32 to vector<256x128xi32>
    %22 = arith.muli %20, %21 : vector<256x128xi32>
    %c15_i32 = arith.constant 15 : i32
    %23 = vector.broadcast %c15_i32 : i32 to vector<256x128xi32>
    %24 = arith.shrui %22, %23 : vector<256x128xi32>
    %25 = arith.xori %22, %24 : vector<256x128xi32>
    %c-2073254261_i32 = arith.constant -2073254261 : i32
    %26 = vector.broadcast %c-2073254261_i32 : i32 to vector<256x128xi32>
    %27 = arith.muli %25, %26 : vector<256x128xi32>
    %c16_i32_6 = arith.constant 16 : i32
    %28 = vector.broadcast %c16_i32_6 : i32 to vector<256x128xi32>
    %29 = arith.shrui %27, %28 : vector<256x128xi32>
    %30 = arith.xori %27, %29 : vector<256x128xi32>
    %c8_i32 = arith.constant 8 : i32
    %31 = vector.broadcast %c8_i32 : i32 to vector<256x128xi32>
    %32 = arith.shrui %30, %31 : vector<256x128xi32>
    %c11744051_i32 = arith.constant 11744051 : i32
    %33 = vector.broadcast %c11744051_i32 : i32 to vector<256x128xi32>
    %34 = arith.cmpi slt, %32, %33 : vector<256x128xi32>
    %cst_7 = arith.constant 1.42857146 : f32
    %35 = vector.broadcast %cst_7 : f32 to vector<256x128xf32>
    %36 = arith.mulf %7, %35 : vector<256x128xf32>
    %cst_8 = arith.constant 0.000000e+00 : f32
    %37 = vector.broadcast %cst_8 : f32 to vector<256x128xf32>
    %38 = arith.select %34, %36, %37 : vector<256x128xi1>, vector<256x128xf32>
    %c0_9 = arith.constant 0 : index
    %c0_10 = arith.constant 0 : index
    %39 = vector.load %arg4[%c0_9, %c0_10] : memref<256x128xf32, #tpu.memory_space<vmem>>, vector<256x128xf32>
    tpu.vector_store %arg4[%c0_9, %c0_10], %38 {strides = array<i32>} : memref<256x128xf32, #tpu.memory_space<vmem>>, vector<256x128xf32>,
    return
  }
  func.func @transform_0(%arg0: i32) -> (i32, i32) {
    %c0_i32 = arith.constant 0 : i32
    %c0_i32_0 = arith.constant 0 : i32
    return %arg0, %c0_i32 : i32, i32
  }
  func.func @transform_1(%arg0: i32) -> (i32, i32) {
    %c0_i32 = arith.constant 0 : i32
    %c0_i32_0 = arith.constant 0 : i32
    %c0_i32_1 = arith.constant 0 : i32
    return %c0_i32, %c0_i32_0 : i32, i32
  }
  func.func @transform_2(%arg0: i32) -> (i32, i32) {
    %c0_i32 = arith.constant 0 : i32
    %c0_i32_0 = arith.constant 0 : i32
    %c0_i32_1 = arith.constant 0 : i32
    return %c0_i32, %c0_i32_0 : i32, i32
  }
  func.func @transform_3(%arg0: i32) -> (i32, i32) {
    %c0_i32 = arith.constant 0 : i32
    %c0_i32_0 = arith.constant 0 : i32
    return %arg0, %c0_i32 : i32, i32
  }
}

</mosaic_0001>

<llo_original>
// kernel: tpu_custom_call.1
$region0: #{tpu_custom_call.1}
  #allocation0 [shape = 'u32[]', space=smem, size = 0x4, offset = 0x4, fixed_abs, tag = 'smem constant byte address 0x4 - core index']
  #allocation1 [shape = 'u32[144,128]{1,0:T(1,128)}', space=vmem, size = 0x12000, scoped, tag = 'internal scratch']
  %s0 = inlined_call_operand.hbm [shape: bf16[512,128], index: 0, kind: input, shape index: {}]
  %s1 = inlined_call_operand.hbm [shape: bf16[128,128], index: 1, kind: input, shape index: {}]
  %s2 = inlined_call_operand.vmem [shape: f32[1,128], index: 2, kind: input, shape index: {}]
  %s3 = inlined_call_operand.hbm [shape: f32[512,128], index: 3, kind: output, shape index: {}]
  %s4 = sld [smem:[#allocation0]]
  $region53: #{tpu_custom_call.1} parent=0
    _
  %s6 = ssub.s32 1, %s4
  %s7 = scalar_select 0, %s6, %s4
  $region1: #{tpu_custom_call.1} parent=0
    #allocation2 [shape = 'u8[131072]{0}', space=vmem, size = 0x20000, scoped, tag = 'input window, operand 0']
    #allocation3 [shape = 's32[2]{0}', space=sflag, size = 0x8, scoped, tag = 'scoped memory for tpu_custom_call.1']
    #allocation4 [shape = 's32[2]{0}', space=sflag, size = 0x8, scoped, tag = 'scoped memory for tpu_custom_call.1']
    #allocation5 [shape = 'u8[32768]{0}', space=vmem, size = 0x8000, scoped, tag = 'input window, operand 1, single buffered']
    #allocation6 [shape = 's32[1]{0}', space=sflag, size = 0x4, scoped, tag = 'scoped memory for tpu_custom_call.1']
    #allocation7 [shape = 'u8[262144]{0}', space=vmem, size = 0x40000, scoped, tag = 'output window, operand 0']
    %8 = vsyncpa [#allocation3], 0
    %s9 = scalar_lea.sflag [#allocation3], 1
    %10 = vsyncpa %s9, 0
    %11 = vsyncpa [#allocation6], 0
    %12 = vsyncpa [#allocation4], 0
    %s13 = scalar_lea.sflag [#allocation4], 1
    %14 = vsyncpa %s13, 0
    loop: start=0, step=1, limit=4
    $region2: #{tpu_custom_call.1} parent=1 // loop_pre_header
      _
    $region3: #{tpu_custom_call.1} parent=1 // loop_header
      %s16 = sphi 0, %s20
      %p17 = scmp.ge.s32.totalorder %s16, 4
      %s26 = sphi 0, %s28
      %s29 = sphi 0, %s26
      %s30 = sphi 0, %s29
      %s46 = sphi 0, %s30
      %s50 = sphi 0, %s50
      %s52 = sphi 0, %s50
      %s53 = sphi 0, %s52
      %s67 = sphi 0, %s53
      %s71 = sphi 0, %s71
      %s73 = sphi 0, %s71
      %s74 = sphi 0, %s73
      %s88 = sphi 0, %s74
      %s94 = sphi 0, %s96
      %s97 = sphi 0, %s94
      %s98 = sphi 0, %s97
      %s114 = sphi 0, %s98
    $region4: #{tpu_custom_call.1} parent=1 // loop_header_branch
      %19 = sbr.rel (%p17) target = $region8
    $region5: #{tpu_custom_call.1} parent=1 // loop_body
      %s21 = ssub.s32 %s16, 1
      %s22 = ssub.s32 %s16, 2
      %s23 = sadd.s32 %s16, 1
      %s24 = ssub.s32 %s16, %s23
      %p25 = scmp.eq.s32.totalorder %s24, 0
      %s27 = sadd.s32 %s26, 1
      %s28 = scalar_select %p25, %s26, %s27
      %p31 = pneg %p25
      %p32 = scmp.eq.s32.totalorder %s16, 1
      %p33 = por %p31, %p32
      %p34 = scmp.ne.s32.totalorder %s26, %s29
      %p35 = scmp.eq.s32.totalorder %s16, 0
      %p36 = por %p34, %p35
      %p37 = scmp.ne.s32.totalorder %s26, %s29
      %p38 = scmp.eq.s32.totalorder %s21, 1
      %p39 = por %p37, %p38
      %p40 = scmp.ne.s32.totalorder %s29, %s30
      %p41 = scmp.eq.s32.totalorder %s21, 0
      %p42 = por %p40, %p41
      %p43 = scmp.ne.s32.totalorder %s29, %s30
      %p44 = scmp.eq.s32.totalorder %s22, 1
      %p45 = por %p43, %p44
      %p47 = scmp.ne.s32.totalorder %s30, %s46
      %p48 = scmp.eq.s32.totalorder %s22, 0
      %p49 = por %p47, %p48
      %s51 = sadd.s32 %s50, 1
      %p54 = scmp.eq.s32.totalorder %s16, 1
      %p55 = scmp.ne.s32.totalorder %s50, %s52
      %p56 = scmp.eq.s32.totalorder %s16, 0
      %p57 = por %p55, %p56
      %p58 = scmp.ne.s32.totalorder %s50, %s52
      %p59 = scmp.eq.s32.totalorder %s21, 1
      %p60 = por %p58, %p59
      %p61 = scmp.ne.s32.totalorder %s52, %s53
      %p62 = scmp.eq.s32.totalorder %s21, 0
      %p63 = por %p61, %p62
      %p64 = scmp.ne.s32.totalorder %s52, %s53
      %p65 = scmp.eq.s32.totalorder %s22, 1
      %p66 = por %p64, %p65
      %p68 = scmp.ne.s32.totalorder %s53, %s67
      %p69 = scmp.eq.s32.totalorder %s22, 0
      %p70 = por %p68, %p69
      %s72 = sadd.s32 %s71, 1
      %p75 = scmp.eq.s32.totalorder %s16, 1
      %p76 = scmp.ne.s32.totalorder %s71, %s73
      %p77 = scmp.eq.s32.totalorder %s16, 0
      %p78 = por %p76, %p77
      %p79 = scmp.ne.s32.totalorder %s71, %s73
      %p80 = scmp.eq.s32.totalorder %s21, 1
      %p81 = por %p79, %p80
      %p82 = scmp.ne.s32.totalorder %s73, %s74
      %p83 = scmp.eq.s32.totalorder %s21, 0
      %p84 = por %p82, %p83
      %p85 = scmp.ne.s32.totalorder %s73, %s74
      %p86 = scmp.eq.s32.totalorder %s22, 1
      %p87 = por %p85, %p86
      %p89 = scmp.ne.s32.totalorder %s74, %s88
      %p90 = scmp.eq.s32.totalorder %s22, 0
      %p91 = por %p89, %p90
      %s92 = ssub.s32 %s16, %s23
      %p93 = scmp.eq.s32.totalorder %s92, 0
      %s95 = sadd.s32 %s94, 1
      %s96 = scalar_select %p93, %s94, %s95
      %p99 = pneg %p93
      %p100 = scmp.eq.s32.totalorder %s16, 1
      %p101 = por %p99, %p100
      %p102 = scmp.ne.s32.totalorder %s94, %s97
      %p103 = scmp.eq.s32.totalorder %s16, 0
      %p104 = por %p102, %p103
      %p105 = scmp.ne.s32.totalorder %s94, %s97
      %p106 = scmp.eq.s32.totalorder %s21, 1
      %p107 = por %p105, %p106
      %p108 = scmp.ne.s32.totalorder %s97, %s98
      %p109 = scmp.eq.s32.totalorder %s21, 0
      %p110 = por %p108, %p109
      %p111 = scmp.ne.s32.totalorder %s97, %s98
      %p112 = scmp.eq.s32.totalorder %s22, 1
      %p113 = por %p111, %p112
      %p115 = scmp.ne.s32.totalorder %s98, %s114
      %p116 = scmp.eq.s32.totalorder %s22, 0
      %p117 = por %p115, %p116
      %p118 = scmp.le.s32.totalorder 1, %s16
      %p119 = scmp.lt.s32.totalorder %s16, 3
      %p120 = pnand %p118, %p119
      %p121 = pneg %p120
      // Predicated region
      $region9: #{tpu_custom_call.1} parent=5 // pred_check
        _
      $region10: #{tpu_custom_call.1} parent=5 // pred_check_branch
        %123 = sbr.rel (%p120) target = $region12
      $region11: #{tpu_custom_call.1} parent=5 // pred_region
        %s124 = ssub.s32 %s16, 1
        // Predicated region
        $region13: #{tpu_custom_call.1} parent=11 // pred_check
          %p125 = pneg %p63
        $region14: #{tpu_custom_call.1} parent=11 // pred_check_branch
          %127 = sbr.rel (%p125) target = $region16
        $region15: #{tpu_custom_call.1} parent=11 // pred_region
          %s129 = ssub.s32 1024, 1024
          %130 = vsyncadd [#allocation6], %s129
          %s131 = sshll.u32 [#allocation5], 4
          %s132 = int_to_ptr.vmem [resolvable:$true] %s131
          %137 = dma.hbm_to_vmem [thread:$0]  %s1, 1024, %s132, [#allocation6], 64, 64, 4
        $region16: #{tpu_custom_call.1} parent=11 // pred_fallthru
          _
        // Predicated region
        $region17: #{tpu_custom_call.1} parent=11 // pred_check
          %p138 = pneg %p84
        $region18: #{tpu_custom_call.1} parent=11 // pred_check_branch
          %140 = sbr.rel (%p138) target = $region20
        $region19: #{tpu_custom_call.1} parent=11 // pred_region
          _
        $region20: #{tpu_custom_call.1} parent=11 // pred_fallthru
          _
      $region12: #{tpu_custom_call.1} parent=5 // pred_fallthru
        _
      %p141 = scmp.lt.s32.totalorder %s16, 2
      // Predicated region
      $region21: #{tpu_custom_call.1} parent=5 // pred_check
        %p142 = pneg %p141
      $region22: #{tpu_custom_call.1} parent=5 // pred_check_branch
        %144 = sbr.rel (%p142) target = $region24
      $region23: #{tpu_custom_call.1} parent=5 // pred_region
        // Predicated region
        $region25: #{tpu_custom_call.1} parent=23 // pred_check
          %p145 = pneg %p36
        $region26: #{tpu_custom_call.1} parent=23 // pred_check_branch
          %147 = sbr.rel (%p145) target = $region28
        $region27: #{tpu_custom_call.1} parent=23 // pred_region
          %s148 = sand.u32 %s26, 1
          %s149 = scalar_lea.sflag [#allocation3], %s148
          %s150 = sand.u32 %s26, 1
          %s151 = smul.addr %s150, 128
          %s152 = scalar_lea.vmem [#allocation2], %s151
          %s153 = smul.u32 32, %s16
          %s155 = ssub.s32 2048, 2048
          %156 = vsyncadd %s149, %s155
          %s157 = smul.addr %s153, 64
          %s158 = scalar_lea.hbm %s0, %s157
          %s159 = sshll.u32 %s152, 4
          %s160 = int_to_ptr.vmem [resolvable:$true] %s159
          %165 = dma.hbm_to_vmem [thread:$0]  %s158, 2048, %s160, %s149, 64, 64, 4
        $region28: #{tpu_custom_call.1} parent=23 // pred_fallthru
          _
      $region24: #{tpu_custom_call.1} parent=5 // pred_fallthru
        _
      %p166 = scmp.le.s32.totalorder 1, %s16
      %p167 = scmp.lt.s32.totalorder %s16, 3
      %p168 = pnand %p166, %p167
      %p169 = pneg %p168
      // Predicated region
      $region29: #{tpu_custom_call.1} parent=5 // pred_check
        _
      $region30: #{tpu_custom_call.1} parent=5 // pred_check_branch
        %171 = sbr.rel (%p168) target = $region32
      $region31: #{tpu_custom_call.1} parent=5 // pred_region
        %s172 = ssub.s32 %s16, 1
        %s173 = sand.u32 %s29, 1
        %s174 = scalar_lea.sflag [#allocation3], %s173
        %s175 = sand.u32 %s29, 1
        %s176 = smul.addr %s175, 128
        %s177 = scalar_lea.vmem [#allocation2], %s176
        // Predicated region
        $region33: #{tpu_custom_call.1} parent=31 // pred_check
          %p178 = pneg %p42
        $region34: #{tpu_custom_call.1} parent=31 // pred_check_branch
          %180 = sbr.rel (%p178) target = $region36
        $region35: #{tpu_custom_call.1} parent=31 // pred_region
          %181 = dma.done %s174, 2048
        $region36: #{tpu_custom_call.1} parent=31 // pred_fallthru
          _
        // Predicated region
        $region37: #{tpu_custom_call.1} parent=31 // pred_check
          %p182 = pneg %p63
        $region38: #{tpu_custom_call.1} parent=31 // pred_check_branch
          %184 = sbr.rel (%p182) target = $region40
        $region39: #{tpu_custom_call.1} parent=31 // pred_region
          %185 = dma.done [#allocation6], 1024
        $region40: #{tpu_custom_call.1} parent=31 // pred_fallthru
          _
        %s186 = sand.u32 %s29, 1
        %s187 = scalar_lea.sflag [#allocation3], %s186
        %s188 = sand.u32 %s29, 1
        %s189 = smul.addr %s188, 128
        %s190 = scalar_lea.vmem [#allocation2], %s189
        %p191 = pneg %p42
        %p192 = pneg %p39
        %p193 = pneg %p63
        %p194 = pneg %p60
        %p195 = pneg %p84
        %p196 = pneg %p81
        %p197 = pneg %p110
        %p198 = pneg %p107
        %s199 = sand.u32 %s97, 1
        %s200 = scalar_lea.sflag [#allocation4], %s199
        %s201 = sand.u32 %s97, 1
        %s202 = smul.addr %s201, 256
        %s203 = scalar_lea.vmem [#allocation7], %s202
        %s204 = smul.u32 32, %s21
        %s205 = smul.u32 32, %s21
        %v207 = vld [vmem:[%s177] sm:$0xf]
        %v208 = vld [vmem:[%s177 + $0x4] sm:$0xf]
        %v209 = vld [vmem:[%s177 + $0x8] sm:$0xf]
        %v210 = vld [vmem:[%s177 + $0xc] sm:$0xf]
        %v211 = vld [vmem:[%s177 + $0x10] sm:$0xf]
        %v212 = vld [vmem:[%s177 + $0x14] sm:$0xf]
        %v213 = vld [vmem:[%s177 + $0x18] sm:$0xf]
        %v214 = vld [vmem:[%s177 + $0x1c] sm:$0xf]
        %v215 = vld [vmem:[%s177 + $0x20] sm:$0xf]
        %v216 = vld [vmem:[%s177 + $0x24] sm:$0xf]
        %v217 = vld [vmem:[%s177 + $0x28] sm:$0xf]
        %v218 = vld [vmem:[%s177 + $0x2c] sm:$0xf]
        %v219 = vld [vmem:[%s177 + $0x30] sm:$0xf]
        %v220 = vld [vmem:[%s177 + $0x34] sm:$0xf]
        %v221 = vld [vmem:[%s177 + $0x38] sm:$0xf]
        %v222 = vld [vmem:[%s177 + $0x3c] sm:$0xf]
        %v223 = vld [vmem:[%s177 + $0x40] sm:$0xf]
        %v224 = vld [vmem:[%s177 + $0x44] sm:$0xf]
        %v225 = vld [vmem:[%s177 + $0x48] sm:$0xf]
        %v226 = vld [vmem:[%s177 + $0x4c] sm:$0xf]
        %v227 = vld [vmem:[%s177 + $0x50] sm:$0xf]
        %v228 = vld [vmem:[%s177 + $0x54] sm:$0xf]
        %v229 = vld [vmem:[%s177 + $0x58] sm:$0xf]
        %v230 = vld [vmem:[%s177 + $0x5c] sm:$0xf]
        %v231 = vld [vmem:[%s177 + $0x60] sm:$0xf]
        %v232 = vld [vmem:[%s177 + $0x64] sm:$0xf]
        %v233 = vld [vmem:[%s177 + $0x68] sm:$0xf]
        %v234 = vld [vmem:[%s177 + $0x6c] sm:$0xf]
        %v235 = vld [vmem:[%s177 + $0x70] sm:$0xf]
        %v236 = vld [vmem:[%s177 + $0x74] sm:$0xf]
        %v237 = vld [vmem:[%s177 + $0x78] sm:$0xf]
        %v238 = vld [vmem:[%s177 + $0x7c] sm:$0xf]
        %v239 = vld [vmem:[#allocation5] sm:$0xf]
        %v240 = vld [vmem:[#allocation5 + $0x4] sm:$0xf]
        %v241 = vld [vmem:[#allocation5 + $0x8] sm:$0xf]
        %v242 = vld [vmem:[#allocation5 + $0xc] sm:$0xf]
        %v243 = vld [vmem:[#allocation5 + $0x10] sm:$0xf]
        %v244 = vld [vmem:[#allocation5 + $0x14] sm:$0xf]
        %v245 = vld [vmem:[#allocation5 + $0x18] sm:$0xf]
        %v246 = vld [vmem:[#allocation5 + $0x1c] sm:$0xf]
        %v247 = vld [vmem:[#allocation5 + $0x20] sm:$0xf]
        %v248 = vld [vmem:[#allocation5 + $0x24] sm:$0xf]
        %v249 = vld [vmem:[#allocation5 + $0x28] sm:$0xf]
        %v250 = vld [vmem:[#allocation5 + $0x2c] sm:$0xf]
        %v251 = vld [vmem:[#allocation5 + $0x30] sm:$0xf]
        %v252 = vld [vmem:[#allocation5 + $0x34] sm:$0xf]
        %v253 = vld [vmem:[#allocation5 + $0x38] sm:$0xf]
        %v254 = vld [vmem:[#allocation5 + $0x3c] sm:$0xf]
        %v255 = vld [vmem:[%s2] sm:$0x1]
        %v257 = vlaneseq
        %v258 = vshrl.u32 %v257, 7
        %v259 = vsub.s32 0, %v258
        %v260 = vrot.slane %v255, %v259
        %v294 = vunpack.c.l.b16 %v207
        %v295 = vunpack.c.l.b16 %v208
        %v296 = vunpack.c.l.b16 %v209
        %v297 = vunpack.c.l.b16 %v210
        %v298 = vunpack.c.l.b16 %v211
        %v299 = vunpack.c.l.b16 %v212
        %v300 = vunpack.c.l.b16 %v213
        %v301 = vunpack.c.l.b16 %v214
        %v302 = vunpack.c.l.b16 %v215
        %v303 = vunpack.c.l.b16 %v216
        %v304 = vunpack.c.l.b16 %v217
        %v305 = vunpack.c.l.b16 %v218
        %v306 = vunpack.c.l.b16 %v219
        %v307 = vunpack.c.l.b16 %v220
        %v308 = vunpack.c.l.b16 %v221
        %v309 = vunpack.c.l.b16 %v222
        %v310 = vunpack.c.l.b16 %v223
        %v311 = vunpack.c.l.b16 %v224
        %v312 = vunpack.c.l.b16 %v225
        %v313 = vunpack.c.l.b16 %v226
        %v314 = vunpack.c.l.b16 %v227
        %v315 = vunpack.c.l.b16 %v228
        %v316 = vunpack.c.l.b16 %v229
        %v317 = vunpack.c.l.b16 %v230
        %v318 = vunpack.c.l.b16 %v231
        %v319 = vunpack.c.l.b16 %v232
        %v320 = vunpack.c.l.b16 %v233
        %v321 = vunpack.c.l.b16 %v234
        %v322 = vunpack.c.l.b16 %v235
        %v323 = vunpack.c.l.b16 %v236
        %v324 = vunpack.c.l.b16 %v237
        %v325 = vunpack.c.l.b16 %v238
        %v326 = vpack.c.b16 %v295, %v294
        %v327 = vpack.c.b16 %v297, %v296
        %v328 = vpack.c.b16 %v299, %v298
        %v329 = vpack.c.b16 %v301, %v300
        %v330 = vpack.c.b16 %v303, %v302
        %v331 = vpack.c.b16 %v305, %v304
        %v332 = vpack.c.b16 %v307, %v306
        %v333 = vpack.c.b16 %v309, %v308
        %v334 = vpack.c.b16 %v311, %v310
        %v335 = vpack.c.b16 %v313, %v312
        %v336 = vpack.c.b16 %v315, %v314
        %v337 = vpack.c.b16 %v317, %v316
        %v338 = vpack.c.b16 %v319, %v318
        %v339 = vpack.c.b16 %v321, %v320
        %v340 = vpack.c.b16 %v323, %v322
        %v341 = vpack.c.b16 %v325, %v324
        %v374 = vunpack.c.l.b16 %v239
        %v375 = vunpack.c.l.b16 %v240
        %v376 = vunpack.c.l.b16 %v241
        %v377 = vunpack.c.l.b16 %v242
        %v378 = vunpack.c.l.b16 %v243
        %v379 = vunpack.c.l.b16 %v244
        %v380 = vunpack.c.l.b16 %v245
        %v381 = vunpack.c.l.b16 %v246
        %v382 = vunpack.c.l.b16 %v247
        %v383 = vunpack.c.l.b16 %v248
        %v384 = vunpack.c.l.b16 %v249
        %v385 = vunpack.c.l.b16 %v250
        %v386 = vunpack.c.l.b16 %v251
        %v387 = vunpack.c.l.b16 %v252
        %v388 = vunpack.c.l.b16 %v253
        %v389 = vunpack.c.l.b16 %v254
        %v390 = vpack.c.b16 %v375, %v374
        %v391 = vpack.c.b16 %v377, %v376
        %v392 = vpack.c.b16 %v379, %v378
        %v393 = vpack.c.b16 %v381, %v380
        %v394 = vpack.c.b16 %v383, %v382
        %v395 = vpack.c.b16 %v385, %v384
        %v396 = vpack.c.b16 %v387, %v386
        %v397 = vpack.c.b16 %v389, %v388
        %406 = vmatprep.subr.bf16.mxu0 0
        %407 = vmatpush1.bf16.msra.mxu0 %v397
        %408 = vmatprep.subr.bf16.mxu0 0
        %409 = vmatpush1.bf16.msra.mxu0 %v396
        %410 = vmatprep.subr.bf16.mxu0 0
        %411 = vmatpush1.bf16.msra.mxu0 %v395
        %412 = vmatprep.subr.bf16.mxu0 0
        %413 = vmatpush1.bf16.msra.mxu0 %v394
        %414 = vmatprep.subr.bf16.mxu0 0
        %415 = vmatpush1.bf16.msra.mxu0 %v393
        %416 = vmatprep.subr.bf16.mxu0 0
        %417 = vmatpush1.bf16.msra.mxu0 %v392
        %418 = vmatprep.subr.bf16.mxu0 0
        %419 = vmatpush1.bf16.msra.mxu0 %v391
        %420 = vmatprep.subr.bf16.mxu0 0
        %421 = vmatpush1.bf16.msra.mxu0 %v390
        %422 = vmatprep.subr.bf16.mxu0 0
        %423 = vmatpush2.bf16.msra.mxu0 0
        %424 = vmatprep.subr.bf16.mxu0 0
        %425 = vmatpush2.bf16.msra.mxu0 0
        %426 = vmatprep.subr.bf16.mxu0 0
        %427 = vmatpush2.bf16.msra.mxu0 0
        %428 = vmatprep.subr.bf16.mxu0 0
        %429 = vmatpush2.bf16.msra.mxu0 0
        %430 = vmatprep.subr.bf16.mxu0 0
        %431 = vmatpush2.bf16.msra.mxu0 0
        %432 = vmatprep.subr.bf16.mxu0 0
        %433 = vmatpush2.bf16.msra.mxu0 0
        %434 = vmatprep.subr.bf16.mxu0 0
        %435 = vmatpush2.bf16.msra.mxu0 0
        %436 = vmatprep.subr.bf16.mxu0 0
        %437 = vmatpush2.bf16.msra.mxu0 0
        %438 = vmatprep.mubr.bf16.mxu0 0
        %439 = vmatmul.mubr.bf16.gmra.mxu0 %v326
        %v440 = vpop.f32.mrf.mxu0
        %v441 = vadd.f32 %v260, %v440
        %v442 = vpop.f32.mrf.mxu0
        %v443 = vpop.f32.mrf.mxu0
        %v444 = vadd.f32 %v260, %v443
        %v445 = vpop.f32.mrf.mxu0
        %446 = vmatprep.mubr.bf16.mxu0 0
        %447 = vmatmul.mubr.bf16.gmra.mxu0 %v327
        %v448 = vpop.f32.mrf.mxu0
        %v449 = vadd.f32 %v260, %v448
        %v450 = vpop.f32.mrf.mxu0
        %v451 = vpop.f32.mrf.mxu0
        %v452 = vadd.f32 %v260, %v451
        %v453 = vpop.f32.mrf.mxu0
        %454 = vmatprep.mubr.bf16.mxu0 0
        %455 = vmatmul.mubr.bf16.gmra.mxu0 %v328
        %v456 = vpop.f32.mrf.mxu0
        %v457 = vadd.f32 %v260, %v456
        %v458 = vpop.f32.mrf.mxu0
        %v459 = vpop.f32.mrf.mxu0
        %v460 = vadd.f32 %v260, %v459
        %v461 = vpop.f32.mrf.mxu0
        %462 = vmatprep.mubr.bf16.mxu0 0
        %463 = vmatmul.mubr.bf16.gmra.mxu0 %v329
        %v464 = vpop.f32.mrf.mxu0
        %v465 = vadd.f32 %v260, %v464
        %v466 = vpop.f32.mrf.mxu0
        %v467 = vpop.f32.mrf.mxu0
        %v468 = vadd.f32 %v260, %v467
        %v469 = vpop.f32.mrf.mxu0
        %470 = vmatprep.mubr.bf16.mxu0 0
        %471 = vmatmul.mubr.bf16.gmra.mxu0 %v330
        %v472 = vpop.f32.mrf.mxu0
        %v473 = vadd.f32 %v260, %v472
        %v474 = vpop.f32.mrf.mxu0
        %v475 = vpop.f32.mrf.mxu0
        %v476 = vadd.f32 %v260, %v475
        %v477 = vpop.f32.mrf.mxu0
        %478 = vmatprep.mubr.bf16.mxu0 0
        %479 = vmatmul.mubr.bf16.gmra.mxu0 %v331
        %v480 = vpop.f32.mrf.mxu0
        %v481 = vadd.f32 %v260, %v480
        %v482 = vpop.f32.mrf.mxu0
        %v483 = vpop.f32.mrf.mxu0
        %v484 = vadd.f32 %v260, %v483
        %v485 = vpop.f32.mrf.mxu0
        %486 = vmatprep.mubr.bf16.mxu0 0
        %487 = vmatmul.mubr.bf16.gmra.mxu0 %v332
        %v488 = vpop.f32.mrf.mxu0
        %v489 = vadd.f32 %v260, %v488
        %v490 = vpop.f32.mrf.mxu0
        %v491 = vpop.f32.mrf.mxu0
        %v492 = vadd.f32 %v260, %v491
        %v493 = vpop.f32.mrf.mxu0
        %494 = vmatprep.mubr.bf16.mxu0 0
        %495 = vmatmul.mubr.bf16.gmra.mxu0 %v333
        %v496 = vpop.f32.mrf.mxu0
        %v497 = vadd.f32 %v260, %v496
        %v498 = vpop.f32.mrf.mxu0
        %v499 = vpop.f32.mrf.mxu0
        %v500 = vadd.f32 %v260, %v499
        %v501 = vpop.f32.mrf.mxu0
        %502 = vmatprep.mubr.bf16.mxu0 0
        %503 = vmatmul.mubr.bf16.gmra.mxu0 %v334
        %v504 = vpop.f32.mrf.mxu0
        %v505 = vadd.f32 %v260, %v504
        %v506 = vpop.f32.mrf.mxu0
        %v507 = vpop.f32.mrf.mxu0
        %v508 = vadd.f32 %v260, %v507
        %v509 = vpop.f32.mrf.mxu0
        %510 = vmatprep.mubr.bf16.mxu0 0
        %511 = vmatmul.mubr.bf16.gmra.mxu0 %v335
        %v512 = vpop.f32.mrf.mxu0
        %v513 = vadd.f32 %v260, %v512
        %v514 = vpop.f32.mrf.mxu0
        %v515 = vpop.f32.mrf.mxu0
        %v516 = vadd.f32 %v260, %v515
        %v517 = vpop.f32.mrf.mxu0
        %518 = vmatprep.mubr.bf16.mxu0 0
        %519 = vmatmul.mubr.bf16.gmra.mxu0 %v336
        %v520 = vpop.f32.mrf.mxu0
        %v521 = vadd.f32 %v260, %v520
        %v522 = vpop.f32.mrf.mxu0
        %v523 = vpop.f32.mrf.mxu0
        %v524 = vadd.f32 %v260, %v523
        %v525 = vpop.f32.mrf.mxu0
        %526 = vmatprep.mubr.bf16.mxu0 0
        %527 = vmatmul.mubr.bf16.gmra.mxu0 %v337
        %v528 = vpop.f32.mrf.mxu0
        %v529 = vadd.f32 %v260, %v528
        %v530 = vpop.f32.mrf.mxu0
        %v531 = vpop.f32.mrf.mxu0
        %v532 = vadd.f32 %v260, %v531
        %v533 = vpop.f32.mrf.mxu0
        %534 = vmatprep.mubr.bf16.mxu0 0
        %535 = vmatmul.mubr.bf16.gmra.mxu0 %v338
        %v536 = vpop.f32.mrf.mxu0
        %v537 = vadd.f32 %v260, %v536
        %v538 = vpop.f32.mrf.mxu0
        %v539 = vpop.f32.mrf.mxu0
        %v540 = vadd.f32 %v260, %v539
        %v541 = vpop.f32.mrf.mxu0
        %542 = vmatprep.mubr.bf16.mxu0 0
        %543 = vmatmul.mubr.bf16.gmra.mxu0 %v339
        %v544 = vpop.f32.mrf.mxu0
        %v545 = vadd.f32 %v260, %v544
        %v546 = vpop.f32.mrf.mxu0
        %v547 = vpop.f32.mrf.mxu0
        %v548 = vadd.f32 %v260, %v547
        %v549 = vpop.f32.mrf.mxu0
        %550 = vmatprep.mubr.bf16.mxu0 0
        %551 = vmatmul.mubr.bf16.gmra.mxu0 %v340
        %v552 = vpop.f32.mrf.mxu0
        %v553 = vadd.f32 %v260, %v552
        %v554 = vpop.f32.mrf.mxu0
        %v555 = vpop.f32.mrf.mxu0
        %v556 = vadd.f32 %v260, %v555
        %v557 = vpop.f32.mrf.mxu0
        %558 = vmatprep.mubr.bf16.mxu0 0
        %559 = vmatmul.mubr.bf16.gmra.mxu0 %v341
        %v560 = vpop.f32.mrf.mxu0
        %v561 = vadd.f32 %v260, %v560
        %v562 = vpop.f32.mrf.mxu0
        %v563 = vpop.f32.mrf.mxu0
        %v564 = vadd.f32 %v260, %v563
        %v565 = vpop.f32.mrf.mxu0
        %566 = vdwg.mxu0
        %v567 = vmax.f32 %v441, 0.0
        %v568 = vmax.f32 %v444, 0.0
        %v569 = vmax.f32 %v449, 0.0
        %v570 = vmax.f32 %v452, 0.0
        %v571 = vmax.f32 %v457, 0.0
        %v572 = vmax.f32 %v460, 0.0
        %v573 = vmax.f32 %v465, 0.0
        %v574 = vmax.f32 %v468, 0.0
        %v575 = vmax.f32 %v473, 0.0
        %v576 = vmax.f32 %v476, 0.0
        %v577 = vmax.f32 %v481, 0.0
        %v578 = vmax.f32 %v484, 0.0
        %v579 = vmax.f32 %v489, 0.0
        %v580 = vmax.f32 %v492, 0.0
        %v581 = vmax.f32 %v497, 0.0
        %v582 = vmax.f32 %v500, 0.0
        %v583 = vmax.f32 %v505, 0.0
        %v584 = vmax.f32 %v508, 0.0
        %v585 = vmax.f32 %v513, 0.0
        %v586 = vmax.f32 %v516, 0.0
        %v587 = vmax.f32 %v521, 0.0
        %v588 = vmax.f32 %v524, 0.0
        %v589 = vmax.f32 %v529, 0.0
        %v590 = vmax.f32 %v532, 0.0
        %v591 = vmax.f32 %v537, 0.0
        %v592 = vmax.f32 %v540, 0.0
        %v593 = vmax.f32 %v545, 0.0
        %v594 = vmax.f32 %v548, 0.0
        %v595 = vmax.f32 %v553, 0.0
        %v596 = vmax.f32 %v556, 0.0
        %v597 = vmax.f32 %v561, 0.0
        %v598 = vmax.f32 %v564, 0.0
        %v599 = vlaneseq
        %v600 = vshrl.u32 %v599, 7
        %v601 = vadd.s32 %v600, 8
        %v602 = vadd.s32 %v600, 16
        %v603 = vadd.s32 %v600, 24
        %v604 = vadd.s32 %v600, 32
        %v605 = vadd.s32 %v600, 40
        %v606 = vadd.s32 %v600, 48
        %v607 = vadd.s32 %v600, 56
        %v608 = vadd.s32 %v600, 64
        %v609 = vadd.s32 %v600, 72
        %v610 = vadd.s32 %v600, 80
        %v611 = vadd.s32 %v600, 88
        %v612 = vadd.s32 %v600, 96
        %v613 = vadd.s32 %v600, 104
        %v614 = vadd.s32 %v600, 112
        %v615 = vadd.s32 %v600, 120
        %v616 = vadd.s32 %v600, 128
        %v617 = vadd.s32 %v600, 136
        %v618 = vadd.s32 %v600, 144
        %v619 = vadd.s32 %v600, 152
        %v620 = vadd.s32 %v600, 160
        %v621 = vadd.s32 %v600, 168
        %v622 = vadd.s32 %v600, 176
        %v623 = vadd.s32 %v600, 184
        %v624 = vadd.s32 %v600, 192
        %v625 = vadd.s32 %v600, 200
        %v626 = vadd.s32 %v600, 208
        %v627 = vadd.s32 %v600, 216
        %v628 = vadd.s32 %v600, 224
        %v629 = vadd.s32 %v600, 232
        %v630 = vadd.s32 %v600, 240
        %v631 = vadd.s32 %v600, 248
        %v632 = vlaneseq
        %v633 = vand.u32 %v632, 127
        %s634 = smul.u32 %s21, 256
        %v635 = vstv %s634
        %v636 = vadd.s32 %v635, %v600
        %v637 = vadd.s32 %v635, %v601
        %v638 = vadd.s32 %v635, %v602
        %v639 = vadd.s32 %v635, %v603
        %v640 = vadd.s32 %v635, %v604
        %v641 = vadd.s32 %v635, %v605
        %v642 = vadd.s32 %v635, %v606
        %v643 = vadd.s32 %v635, %v607
        %v644 = vadd.s32 %v635, %v608
        %v645 = vadd.s32 %v635, %v609
        %v646 = vadd.s32 %v635, %v610
        %v647 = vadd.s32 %v635, %v611
        %v648 = vadd.s32 %v635, %v612
        %v649 = vadd.s32 %v635, %v613
        %v650 = vadd.s32 %v635, %v614
        %v651 = vadd.s32 %v635, %v615
        %v652 = vadd.s32 %v635, %v616
        %v653 = vadd.s32 %v635, %v617
        %v654 = vadd.s32 %v635, %v618
        %v655 = vadd.s32 %v635, %v619
        %v656 = vadd.s32 %v635, %v620
        %v657 = vadd.s32 %v635, %v621
        %v658 = vadd.s32 %v635, %v622
        %v659 = vadd.s32 %v635, %v623
        %v660 = vadd.s32 %v635, %v624
        %v661 = vadd.s32 %v635, %v625
        %v662 = vadd.s32 %v635, %v626
        %v663 = vadd.s32 %v635, %v627
        %v664 = vadd.s32 %v635, %v628
        %v665 = vadd.s32 %v635, %v629
        %v666 = vadd.s32 %v635, %v630
        %v667 = vadd.s32 %v635, %v631
        %v668 = vmul.u32 %v636, 128
        %v669 = vmul.u32 %v637, 128
        %v670 = vmul.u32 %v638, 128
        %v671 = vmul.u32 %v639, 128
        %v672 = vmul.u32 %v640, 128
        %v673 = vmul.u32 %v641, 128
        %v674 = vmul.u32 %v642, 128
        %v675 = vmul.u32 %v643, 128
        %v676 = vmul.u32 %v644, 128
        %v677 = vmul.u32 %v645, 128
        %v678 = vmul.u32 %v646, 128
        %v679 = vmul.u32 %v647, 128
        %v680 = vmul.u32 %v648, 128
        %v681 = vmul.u32 %v649, 128
        %v682 = vmul.u32 %v650, 128
        %v683 = vmul.u32 %v651, 128
        %v684 = vmul.u32 %v652, 128
        %v685 = vmul.u32 %v653, 128
        %v686 = vmul.u32 %v654, 128
        %v687 = vmul.u32 %v655, 128
        %v688 = vmul.u32 %v656, 128
        %v689 = vmul.u32 %v657, 128
        %v690 = vmul.u32 %v658, 128
        %v691 = vmul.u32 %v659, 128
        %v692 = vmul.u32 %v660, 128
        %v693 = vmul.u32 %v661, 128
        %v694 = vmul.u32 %v662, 128
        %v695 = vmul.u32 %v663, 128
        %v696 = vmul.u32 %v664, 128
        %v697 = vmul.u32 %v665, 128
        %v698 = vmul.u32 %v666, 128
        %v699 = vmul.u32 %v667, 128
        %v700 = vadd.s32 %v668, %v633
        %v701 = vadd.s32 %v669, %v633
        %v702 = vadd.s32 %v670, %v633
        %v703 = vadd.s32 %v671, %v633
        %v704 = vadd.s32 %v672, %v633
        %v705 = vadd.s32 %v673, %v633
        %v706 = vadd.s32 %v674, %v633
        %v707 = vadd.s32 %v675, %v633
        %v708 = vadd.s32 %v676, %v633
        %v709 = vadd.s32 %v677, %v633
        %v710 = vadd.s32 %v678, %v633
        %v711 = vadd.s32 %v679, %v633
        %v712 = vadd.s32 %v680, %v633
        %v713 = vadd.s32 %v681, %v633
        %v714 = vadd.s32 %v682, %v633
        %v715 = vadd.s32 %v683, %v633
        %v716 = vadd.s32 %v684, %v633
        %v717 = vadd.s32 %v685, %v633
        %v718 = vadd.s32 %v686, %v633
        %v719 = vadd.s32 %v687, %v633
        %v720 = vadd.s32 %v688, %v633
        %v721 = vadd.s32 %v689, %v633
        %v722 = vadd.s32 %v690, %v633
        %v723 = vadd.s32 %v691, %v633
        %v724 = vadd.s32 %v692, %v633
        %v725 = vadd.s32 %v693, %v633
        %v726 = vadd.s32 %v694, %v633
        %v727 = vadd.s32 %v695, %v633
        %v728 = vadd.s32 %v696, %v633
        %v729 = vadd.s32 %v697, %v633
        %v730 = vadd.s32 %v698, %v633
        %v731 = vadd.s32 %v699, %v633
        %v732 = vshrl.u32 %v700, 16
        %v733 = vshrl.u32 %v701, 16
        %v734 = vshrl.u32 %v702, 16
        %v735 = vshrl.u32 %v703, 16
        %v736 = vshrl.u32 %v704, 16
        %v737 = vshrl.u32 %v705, 16
        %v738 = vshrl.u32 %v706, 16
        %v739 = vshrl.u32 %v707, 16
        %v740 = vshrl.u32 %v708, 16
        %v741 = vshrl.u32 %v709, 16
        %v742 = vshrl.u32 %v710, 16
        %v743 = vshrl.u32 %v711, 16
        %v744 = vshrl.u32 %v712, 16
        %v745 = vshrl.u32 %v713, 16
        %v746 = vshrl.u32 %v714, 16
        %v747 = vshrl.u32 %v715, 16
        %v748 = vshrl.u32 %v716, 16
        %v749 = vshrl.u32 %v717, 16
        %v750 = vshrl.u32 %v718, 16
        %v751 = vshrl.u32 %v719, 16
        %v752 = vshrl.u32 %v720, 16
        %v753 = vshrl.u32 %v721, 16
        %v754 = vshrl.u32 %v722, 16
        %v755 = vshrl.u32 %v723, 16
        %v756 = vshrl.u32 %v724, 16
        %v757 = vshrl.u32 %v725, 16
        %v758 = vshrl.u32 %v726, 16
        %v759 = vshrl.u32 %v727, 16
        %v760 = vshrl.u32 %v728, 16
        %v761 = vshrl.u32 %v729, 16
        %v762 = vshrl.u32 %v730, 16
        %v763 = vshrl.u32 %v731, 16
        %v764 = vxor.u32 %v700, %v732
        %v765 = vxor.u32 %v701, %v733
        %v766 = vxor.u32 %v702, %v734
        %v767 = vxor.u32 %v703, %v735
        %v768 = vxor.u32 %v704, %v736
        %v769 = vxor.u32 %v705, %v737
        %v770 = vxor.u32 %v706, %v738
        %v771 = vxor.u32 %v707, %v739
        %v772 = vxor.u32 %v708, %v740
        %v773 = vxor.u32 %v709, %v741
        %v774 = vxor.u32 %v710, %v742
        %v775 = vxor.u32 %v711, %v743
        %v776 = vxor.u32 %v712, %v744
        %v777 = vxor.u32 %v713, %v745
        %v778 = vxor.u32 %v714, %v746
        %v779 = vxor.u32 %v715, %v747
        %v780 = vxor.u32 %v716, %v748
        %v781 = vxor.u32 %v717, %v749
        %v782 = vxor.u32 %v718, %v750
        %v783 = vxor.u32 %v719, %v751
        %v784 = vxor.u32 %v720, %v752
        %v785 = vxor.u32 %v721, %v753
        %v786 = vxor.u32 %v722, %v754
        %v787 = vxor.u32 %v723, %v755
        %v788 = vxor.u32 %v724, %v756
        %v789 = vxor.u32 %v725, %v757
        %v790 = vxor.u32 %v726, %v758
        %v791 = vxor.u32 %v727, %v759
        %v792 = vxor.u32 %v728, %v760
        %v793 = vxor.u32 %v729, %v761
        %v794 = vxor.u32 %v730, %v762
        %v795 = vxor.u32 %v731, %v763
        %v796 = vmul.u32 %v764, 2146121005
        %v797 = vmul.u32 %v765, 2146121005
        %v798 = vmul.u32 %v766, 2146121005
        %v799 = vmul.u32 %v767, 2146121005
        %v800 = vmul.u32 %v768, 2146121005
        %v801 = vmul.u32 %v769, 2146121005
        %v802 = vmul.u32 %v770, 2146121005
        %v803 = vmul.u32 %v771, 2146121005
        %v804 = vmul.u32 %v772, 2146121005
        %v805 = vmul.u32 %v773, 2146121005
        %v806 = vmul.u32 %v774, 2146121005
        %v807 = vmul.u32 %v775, 2146121005
        %v808 = vmul.u32 %v776, 2146121005
        %v809 = vmul.u32 %v777, 2146121005
        %v810 = vmul.u32 %v778, 2146121005
        %v811 = vmul.u32 %v779, 2146121005
        %v812 = vmul.u32 %v780, 2146121005
        %v813 = vmul.u32 %v781, 2146121005
        %v814 = vmul.u32 %v782, 2146121005
        %v815 = vmul.u32 %v783, 2146121005
        %v816 = vmul.u32 %v784, 2146121005
        %v817 = vmul.u32 %v785, 2146121005
        %v818 = vmul.u32 %v786, 2146121005
        %v819 = vmul.u32 %v787, 2146121005
        %v820 = vmul.u32 %v788, 2146121005
        %v821 = vmul.u32 %v789, 2146121005
        %v822 = vmul.u32 %v790, 2146121005
        %v823 = vmul.u32 %v791, 2146121005
        %v824 = vmul.u32 %v792, 2146121005
        %v825 = vmul.u32 %v793, 2146121005
        %v826 = vmul.u32 %v794, 2146121005
        %v827 = vmul.u32 %v795, 2146121005
        %v828 = vshrl.u32 %v796, 15
        %v829 = vshrl.u32 %v797, 15
        %v830 = vshrl.u32 %v798, 15
        %v831 = vshrl.u32 %v799, 15
        %v832 = vshrl.u32 %v800, 15
        %v833 = vshrl.u32 %v801, 15
        %v834 = vshrl.u32 %v802, 15
        %v835 = vshrl.u32 %v803, 15
        %v836 = vshrl.u32 %v804, 15
        %v837 = vshrl.u32 %v805, 15
        %v838 = vshrl.u32 %v806, 15
        %v839 = vshrl.u32 %v807, 15
        %v840 = vshrl.u32 %v808, 15
        %v841 = vshrl.u32 %v809, 15
        %v842 = vshrl.u32 %v810, 15
        %v843 = vshrl.u32 %v811, 15
        %v844 = vshrl.u32 %v812, 15
        %v845 = vshrl.u32 %v813, 15
        %v846 = vshrl.u32 %v814, 15
        %v847 = vshrl.u32 %v815, 15
        %v848 = vshrl.u32 %v816, 15
        %v849 = vshrl.u32 %v817, 15
        %v850 = vshrl.u32 %v818, 15
        %v851 = vshrl.u32 %v819, 15
        %v852 = vshrl.u32 %v820, 15
        %v853 = vshrl.u32 %v821, 15
        %v854 = vshrl.u32 %v822, 15
        %v855 = vshrl.u32 %v823, 15
        %v856 = vshrl.u32 %v824, 15
        %v857 = vshrl.u32 %v825, 15
        %v858 = vshrl.u32 %v826, 15
        %v859 = vshrl.u32 %v827, 15
        %v860 = vxor.u32 %v796, %v828
        %v861 = vxor.u32 %v797, %v829
        %v862 = vxor.u32 %v798, %v830
        %v863 = vxor.u32 %v799, %v831
        %v864 = vxor.u32 %v800, %v832
        %v865 = vxor.u32 %v801, %v833
        %v866 = vxor.u32 %v802, %v834
        %v867 = vxor.u32 %v803, %v835
        %v868 = vxor.u32 %v804, %v836
        %v869 = vxor.u32 %v805, %v837
        %v870 = vxor.u32 %v806, %v838
        %v871 = vxor.u32 %v807, %v839
        %v872 = vxor.u32 %v808, %v840
        %v873 = vxor.u32 %v809, %v841
        %v874 = vxor.u32 %v810, %v842
        %v875 = vxor.u32 %v811, %v843
        %v876 = vxor.u32 %v812, %v844
        %v877 = vxor.u32 %v813, %v845
        %v878 = vxor.u32 %v814, %v846
        %v879 = vxor.u32 %v815, %v847
        %v880 = vxor.u32 %v816, %v848
        %v881 = vxor.u32 %v817, %v849
        %v882 = vxor.u32 %v818, %v850
        %v883 = vxor.u32 %v819, %v851
        %v884 = vxor.u32 %v820, %v852
        %v885 = vxor.u32 %v821, %v853
        %v886 = vxor.u32 %v822, %v854
        %v887 = vxor.u32 %v823, %v855
        %v888 = vxor.u32 %v824, %v856
        %v889 = vxor.u32 %v825, %v857
        %v890 = vxor.u32 %v826, %v858
        %v891 = vxor.u32 %v827, %v859
        %v892 = vmul.u32 %v860, 2221713035
        %v893 = vmul.u32 %v861, 2221713035
        %v894 = vmul.u32 %v862, 2221713035
        %v895 = vmul.u32 %v863, 2221713035
        %v896 = vmul.u32 %v864, 2221713035
        %v897 = vmul.u32 %v865, 2221713035
        %v898 = vmul.u32 %v866, 2221713035
        %v899 = vmul.u32 %v867, 2221713035
        %v900 = vmul.u32 %v868, 2221713035
        %v901 = vmul.u32 %v869, 2221713035
        %v902 = vmul.u32 %v870, 2221713035
        %v903 = vmul.u32 %v871, 2221713035
        %v904 = vmul.u32 %v872, 2221713035
        %v905 = vmul.u32 %v873, 2221713035
        %v906 = vmul.u32 %v874, 2221713035
        %v907 = vmul.u32 %v875, 2221713035
        %v908 = vmul.u32 %v876, 2221713035
        %v909 = vmul.u32 %v877, 2221713035
        %v910 = vmul.u32 %v878, 2221713035
        %v911 = vmul.u32 %v879, 2221713035
        %v912 = vmul.u32 %v880, 2221713035
        %v913 = vmul.u32 %v881, 2221713035
        %v914 = vmul.u32 %v882, 2221713035
        %v915 = vmul.u32 %v883, 2221713035
        %v916 = vmul.u32 %v884, 2221713035
        %v917 = vmul.u32 %v885, 2221713035
        %v918 = vmul.u32 %v886, 2221713035
        %v919 = vmul.u32 %v887, 2221713035
        %v920 = vmul.u32 %v888, 2221713035
        %v921 = vmul.u32 %v889, 2221713035
        %v922 = vmul.u32 %v890, 2221713035
        %v923 = vmul.u32 %v891, 2221713035
        %v924 = vshrl.u32 %v892, 16
        %v925 = vshrl.u32 %v893, 16
        %v926 = vshrl.u32 %v894, 16
        %v927 = vshrl.u32 %v895, 16
        %v928 = vshrl.u32 %v896, 16
        %v929 = vshrl.u32 %v897, 16
        %v930 = vshrl.u32 %v898, 16
        %v931 = vshrl.u32 %v899, 16
        %v932 = vshrl.u32 %v900, 16
        %v933 = vshrl.u32 %v901, 16
        %v934 = vshrl.u32 %v902, 16
        %v935 = vshrl.u32 %v903, 16
        %v936 = vshrl.u32 %v904, 16
        %v937 = vshrl.u32 %v905, 16
        %v938 = vshrl.u32 %v906, 16
        %v939 = vshrl.u32 %v907, 16
        %v940 = vshrl.u32 %v908, 16
        %v941 = vshrl.u32 %v909, 16
        %v942 = vshrl.u32 %v910, 16
        %v943 = vshrl.u32 %v911, 16
        %v944 = vshrl.u32 %v912, 16
        %v945 = vshrl.u32 %v913, 16
        %v946 = vshrl.u32 %v914, 16
        %v947 = vshrl.u32 %v915, 16
        %v948 = vshrl.u32 %v916, 16
        %v949 = vshrl.u32 %v917, 16
        %v950 = vshrl.u32 %v918, 16
        %v951 = vshrl.u32 %v919, 16
        %v952 = vshrl.u32 %v920, 16
        %v953 = vshrl.u32 %v921, 16
        %v954 = vshrl.u32 %v922, 16
        %v955 = vshrl.u32 %v923, 16
        %v956 = vxor.u32 %v892, %v924
        %v957 = vxor.u32 %v893, %v925
        %v958 = vxor.u32 %v894, %v926
        %v959 = vxor.u32 %v895, %v927
        %v960 = vxor.u32 %v896, %v928
        %v961 = vxor.u32 %v897, %v929
        %v962 = vxor.u32 %v898, %v930
        %v963 = vxor.u32 %v899, %v931
        %v964 = vxor.u32 %v900, %v932
        %v965 = vxor.u32 %v901, %v933
        %v966 = vxor.u32 %v902, %v934
        %v967 = vxor.u32 %v903, %v935
        %v968 = vxor.u32 %v904, %v936
        %v969 = vxor.u32 %v905, %v937
        %v970 = vxor.u32 %v906, %v938
        %v971 = vxor.u32 %v907, %v939
        %v972 = vxor.u32 %v908, %v940
        %v973 = vxor.u32 %v909, %v941
        %v974 = vxor.u32 %v910, %v942
        %v975 = vxor.u32 %v911, %v943
        %v976 = vxor.u32 %v912, %v944
        %v977 = vxor.u32 %v913, %v945
        %v978 = vxor.u32 %v914, %v946
        %v979 = vxor.u32 %v915, %v947
        %v980 = vxor.u32 %v916, %v948
        %v981 = vxor.u32 %v917, %v949
        %v982 = vxor.u32 %v918, %v950
        %v983 = vxor.u32 %v919, %v951
        %v984 = vxor.u32 %v920, %v952
        %v985 = vxor.u32 %v921, %v953
        %v986 = vxor.u32 %v922, %v954
        %v987 = vxor.u32 %v923, %v955
        %v988 = vshrl.u32 %v956, 8
        %v989 = vshrl.u32 %v957, 8
        %v990 = vshrl.u32 %v958, 8
        %v991 = vshrl.u32 %v959, 8
        %v992 = vshrl.u32 %v960, 8
        %v993 = vshrl.u32 %v961, 8
        %v994 = vshrl.u32 %v962, 8
        %v995 = vshrl.u32 %v963, 8
        %v996 = vshrl.u32 %v964, 8
        %v997 = vshrl.u32 %v965, 8
        %v998 = vshrl.u32 %v966, 8
        %v999 = vshrl.u32 %v967, 8
        %v1000 = vshrl.u32 %v968, 8
        %v1001 = vshrl.u32 %v969, 8
        %v1002 = vshrl.u32 %v970, 8
        %v1003 = vshrl.u32 %v971, 8
        %v1004 = vshrl.u32 %v972, 8
        %v1005 = vshrl.u32 %v973, 8
        %v1006 = vshrl.u32 %v974, 8
        %v1007 = vshrl.u32 %v975, 8
        %v1008 = vshrl.u32 %v976, 8
        %v1009 = vshrl.u32 %v977, 8
        %v1010 = vshrl.u32 %v978, 8
        %v1011 = vshrl.u32 %v979, 8
        %v1012 = vshrl.u32 %v980, 8
        %v1013 = vshrl.u32 %v981, 8
        %v1014 = vshrl.u32 %v982, 8
        %v1015 = vshrl.u32 %v983, 8
        %v1016 = vshrl.u32 %v984, 8
        %v1017 = vshrl.u32 %v985, 8
        %v1018 = vshrl.u32 %v986, 8
        %v1019 = vshrl.u32 %v987, 8
        %vm1020 = vcmp.lt.s32.totalorder %v988, 11744051
        %vm1021 = vcmp.lt.s32.totalorder %v989, 11744051
        %vm1022 = vcmp.lt.s32.totalorder %v990, 11744051
        %vm1023 = vcmp.lt.s32.totalorder %v991, 11744051
        %vm1024 = vcmp.lt.s32.totalorder %v992, 11744051
        %vm1025 = vcmp.lt.s32.totalorder %v993, 11744051
        %vm1026 = vcmp.lt.s32.totalorder %v994, 11744051
        %vm1027 = vcmp.lt.s32.totalorder %v995, 11744051
        %vm1028 = vcmp.lt.s32.totalorder %v996, 11744051
        %vm1029 = vcmp.lt.s32.totalorder %v997, 11744051
        %vm1030 = vcmp.lt.s32.totalorder %v998, 11744051
        %vm1031 = vcmp.lt.s32.totalorder %v999, 11744051
        %vm1032 = vcmp.lt.s32.totalorder %v1000, 11744051
        %vm1033 = vcmp.lt.s32.totalorder %v1001, 11744051
        %vm1034 = vcmp.lt.s32.totalorder %v1002, 11744051
        %vm1035 = vcmp.lt.s32.totalorder %v1003, 11744051
        %vm1036 = vcmp.lt.s32.totalorder %v1004, 11744051
        %vm1037 = vcmp.lt.s32.totalorder %v1005, 11744051
        %vm1038 = vcmp.lt.s32.totalorder %v1006, 11744051
        %vm1039 = vcmp.lt.s32.totalorder %v1007, 11744051
        %vm1040 = vcmp.lt.s32.totalorder %v1008, 11744051
        %vm1041 = vcmp.lt.s32.totalorder %v1009, 11744051
        %vm1042 = vcmp.lt.s32.totalorder %v1010, 11744051
        %vm1043 = vcmp.lt.s32.totalorder %v1011, 11744051
        %vm1044 = vcmp.lt.s32.totalorder %v1012, 11744051
        %vm1045 = vcmp.lt.s32.totalorder %v1013, 11744051
        %vm1046 = vcmp.lt.s32.totalorder %v1014, 11744051
        %vm1047 = vcmp.lt.s32.totalorder %v1015, 11744051
        %vm1048 = vcmp.lt.s32.totalorder %v1016, 11744051
        %vm1049 = vcmp.lt.s32.totalorder %v1017, 11744051
        %vm1050 = vcmp.lt.s32.totalorder %v1018, 11744051
        %vm1051 = vcmp.lt.s32.totalorder %v1019, 11744051
        %v1052 = vmul.f32 %v567, 1.4285715
        %v1053 = vmul.f32 %v568, 1.4285715
        %v1054 = vmul.f32 %v569, 1.4285715
        %v1055 = vmul.f32 %v570, 1.4285715
        %v1056 = vmul.f32 %v571, 1.4285715
        %v1057 = vmul.f32 %v572, 1.4285715
        %v1058 = vmul.f32 %v573, 1.4285715
        %v1059 = vmul.f32 %v574, 1.4285715
        %v1060 = vmul.f32 %v575, 1.4285715
        %v1061 = vmul.f32 %v576, 1.4285715
        %v1062 = vmul.f32 %v577, 1.4285715
        %v1063 = vmul.f32 %v578, 1.4285715
        %v1064 = vmul.f32 %v579, 1.4285715
        %v1065 = vmul.f32 %v580, 1.4285715
        %v1066 = vmul.f32 %v581, 1.4285715
        %v1067 = vmul.f32 %v582, 1.4285715
        %v1068 = vmul.f32 %v583, 1.4285715
        %v1069 = vmul.f32 %v584, 1.4285715
        %v1070 = vmul.f32 %v585, 1.4285715
        %v1071 = vmul.f32 %v586, 1.4285715
        %v1072 = vmul.f32 %v587, 1.4285715
        %v1073 = vmul.f32 %v588, 1.4285715
        %v1074 = vmul.f32 %v589, 1.4285715
        %v1075 = vmul.f32 %v590, 1.4285715
        %v1076 = vmul.f32 %v591, 1.4285715
        %v1077 = vmul.f32 %v592, 1.4285715
        %v1078 = vmul.f32 %v593, 1.4285715
        %v1079 = vmul.f32 %v594, 1.4285715
        %v1080 = vmul.f32 %v595, 1.4285715
        %v1081 = vmul.f32 %v596, 1.4285715
        %v1082 = vmul.f32 %v597, 1.4285715
        %v1083 = vmul.f32 %v598, 1.4285715
        %v1084 = vsel %vm1020, %v1052, 0.0
        %v1085 = vsel %vm1021, %v1053, 0.0
        %v1086 = vsel %vm1022, %v1054, 0.0
        %v1087 = vsel %vm1023, %v1055, 0.0
        %v1088 = vsel %vm1024, %v1056, 0.0
        %v1089 = vsel %vm1025, %v1057, 0.0
        %v1090 = vsel %vm1026, %v1058, 0.0
        %v1091 = vsel %vm1027, %v1059, 0.0
        %v1092 = vsel %vm1028, %v1060, 0.0
        %v1093 = vsel %vm1029, %v1061, 0.0
        %v1094 = vsel %vm1030, %v1062, 0.0
        %v1095 = vsel %vm1031, %v1063, 0.0
        %v1096 = vsel %vm1032, %v1064, 0.0
        %v1097 = vsel %vm1033, %v1065, 0.0
        %v1098 = vsel %vm1034, %v1066, 0.0
        %v1099 = vsel %vm1035, %v1067, 0.0
        %v1100 = vsel %vm1036, %v1068, 0.0
        %v1101 = vsel %vm1037, %v1069, 0.0
        %v1102 = vsel %vm1038, %v1070, 0.0
        %v1103 = vsel %vm1039, %v1071, 0.0
        %v1104 = vsel %vm1040, %v1072, 0.0
        %v1105 = vsel %vm1041, %v1073, 0.0
        %v1106 = vsel %vm1042, %v1074, 0.0
        %v1107 = vsel %vm1043, %v1075, 0.0
        %v1108 = vsel %vm1044, %v1076, 0.0
        %v1109 = vsel %vm1045, %v1077, 0.0
        %v1110 = vsel %vm1046, %v1078, 0.0
        %v1111 = vsel %vm1047, %v1079, 0.0
        %v1112 = vsel %vm1048, %v1080, 0.0
        %v1113 = vsel %vm1049, %v1081, 0.0
        %v1114 = vsel %vm1050, %v1082, 0.0
        %v1115 = vsel %vm1051, %v1083, 0.0
        %1116 = vst [vmem:[%s203] sm:$0xff] %v1084
        %1117 = vst [vmem:[%s203 + $0x8] sm:$0xff] %v1085
        %1118 = vst [vmem:[%s203 + $0x10] sm:$0xff] %v1086
        %1119 = vst [vmem:[%s203 + $0x18] sm:$0xff] %v1087
        %1120 = vst [vmem:[%s203 + $0x20] sm:$0xff] %v1088
        %1121 = vst [vmem:[%s203 + $0x28] sm:$0xff] %v1089
        %1122 = vst [vmem:[%s203 + $0x30] sm:$0xff] %v1090
        %1123 = vst [vmem:[%s203 + $0x38] sm:$0xff] %v1091
        %1124 = vst [vmem:[%s203 + $0x40] sm:$0xff] %v1092
        %1125 = vst [vmem:[%s203 + $0x48] sm:$0xff] %v1093
        %1126 = vst [vmem:[%s203 + $0x50] sm:$0xff] %v1094
        %1127 = vst [vmem:[%s203 + $0x58] sm:$0xff] %v1095
        %1128 = vst [vmem:[%s203 + $0x60] sm:$0xff] %v1096
        %1129 = vst [vmem:[%s203 + $0x68] sm:$0xff] %v1097
        %1130 = vst [vmem:[%s203 + $0x70] sm:$0xff] %v1098
        %1131 = vst [vmem:[%s203 + $0x78] sm:$0xff] %v1099
        %1132 = vst [vmem:[%s203 + $0x80] sm:$0xff] %v1100
        %1133 = vst [vmem:[%s203 + $0x88] sm:$0xff] %v1101
        %1134 = vst [vmem:[%s203 + $0x90] sm:$0xff] %v1102
        %1135 = vst [vmem:[%s203 + $0x98] sm:$0xff] %v1103
        %1136 = vst [vmem:[%s203 + $0xa0] sm:$0xff] %v1104
        %1137 = vst [vmem:[%s203 + $0xa8] sm:$0xff] %v1105
        %1138 = vst [vmem:[%s203 + $0xb0] sm:$0xff] %v1106
        %1139 = vst [vmem:[%s203 + $0xb8] sm:$0xff] %v1107
        %1140 = vst [vmem:[%s203 + $0xc0] sm:$0xff] %v1108
        %1141 = vst [vmem:[%s203 + $0xc8] sm:$0xff] %v1109
        %1142 = vst [vmem:[%s203 + $0xd0] sm:$0xff] %v1110
        %1143 = vst [vmem:[%s203 + $0xd8] sm:$0xff] %v1111
        %1144 = vst [vmem:[%s203 + $0xe0] sm:$0xff] %v1112
        %1145 = vst [vmem:[%s203 + $0xe8] sm:$0xff] %v1113
        %1146 = vst [vmem:[%s203 + $0xf0] sm:$0xff] %v1114
        %1147 = vst [vmem:[%s203 + $0xf8] sm:$0xff] %v1115
        %s1148 = sand.u32 %s97, 1
        %s1149 = scalar_lea.sflag [#allocation4], %s1148
        %s1150 = sand.u32 %s97, 1
        %s1151 = smul.addr %s1150, 256
        %s1152 = scalar_lea.vmem [#allocation7], %s1151
        // Predicated region
        $region41: #{tpu_custom_call.1} parent=31 // pred_check
          %p1153 = pneg %p107
        $region42: #{tpu_custom_call.1} parent=31 // pred_check_branch
          %1155 = sbr.rel (%p1153) target = $region44
        $region43: #{tpu_custom_call.1} parent=31 // pred_region
          %s1156 = smul.u32 32, %s21
          %s1158 = ssub.s32 4096, 4096
          %1159 = vsyncadd %s1149, %s1158
          %s1160 = smul.addr %s1156, 128
          %s1161 = scalar_lea.hbm %s3, %s1160
          %s1162 = sshll.u32 %s1152, 4
          %s1163 = int_to_ptr.vmem [resolvable:$true] %s1162
          %1168 = dma.vmem_to_hbm [thread:$0]  %s1163, 4096, %s1161, %s1149, 128, 128, 8
        $region44: #{tpu_custom_call.1} parent=31 // pred_fallthru
          _
      $region32: #{tpu_custom_call.1} parent=5 // pred_fallthru
        _
      %p1169 = scmp.le.s32.totalorder 2, %s16
      // Predicated region
      $region45: #{tpu_custom_call.1} parent=5 // pred_check
        %p1170 = pneg %p1169
      $region46: #{tpu_custom_call.1} parent=5 // pred_check_branch
        %1172 = sbr.rel (%p1170) target = $region48
      $region47: #{tpu_custom_call.1} parent=5 // pred_region
        %s1173 = ssub.s32 %s16, 2
        // Predicated region
        $region49: #{tpu_custom_call.1} parent=47 // pred_check
          %p1174 = pneg %p113
        $region50: #{tpu_custom_call.1} parent=47 // pred_check_branch
          %1176 = sbr.rel (%p1174) target = $region52
        $region51: #{tpu_custom_call.1} parent=47 // pred_region
          %s1177 = sand.u32 %s98, 1
          %s1178 = scalar_lea.sflag [#allocation4], %s1177
          %s1179 = sand.u32 %s98, 1
          %s1180 = smul.addr %s1179, 256
          %s1181 = scalar_lea.vmem [#allocation7], %s1180
          %1182 = dma.done %s1178, 4096
        $region52: #{tpu_custom_call.1} parent=47 // pred_fallthru
          _
      $region48: #{tpu_custom_call.1} parent=5 // pred_fallthru
        _
    $region6: #{tpu_custom_call.1} parent=1 // loop_footer
      %s20 = sadd.s32 1, %s16
    $region7: #{tpu_custom_call.1} parent=1 // loop_footer_branch
      %15 = sbr.rel target = $region3
    $region8: #{tpu_custom_call.1} parent=1 // loop_exit
      _
    %1183 = vsyncpa [#allocation3], 1
    %s1184 = scalar_lea.sflag [#allocation3], 1
    %1185 = vsyncpa %s1184, 1
    %1186 = vsyncpa [#allocation6], 1
    %1187 = vsyncpa [#allocation4], 1
    %s1188 = scalar_lea.sflag [#allocation4], 1
    %1189 = vsyncpa %s1188, 1

</llo_original>
